<compile_context>
chip_gen: v5e
topology: v5e:2x2
jax: 0.10.0
libtpu: 0.0.40
codegen_flags: <defaults>
</compile_context>

<pallas_src>
import jax
import jax.numpy as jnp
from jax.experimental import pallas as pl
from jax.experimental.pallas import tpu as pltpu


def _densenet1_kernel(x_ref, w1c_ref, b1c_ref, w2_ref, b2c_ref, o_ref):
    """Single fused step:
         h   = relu(x @ W1cat + b1cat)            one [B,D] @ [D,G*D] matmul
         y_g = h[:, gD:(g+1)D] @ W2_g              G block-diagonal matmuls
         out = hardswish(concat_g(y_g) + b2cat)    one lane-dense [B, G*D] store
    """
    B, D = x_ref.shape
    G = w2_ref.shape[0]

    x = x_ref[...].astype(jnp.bfloat16)           # [B, D]      bf16 for MXU
    w1 = w1c_ref[...]                             # [D, G*D]    bf16
    h = jnp.dot(x, w1, preferred_element_type=jnp.float32) + b1c_ref[...]
    h = jnp.maximum(h, 0.0)                       # ReLU, f32
    h_bf = h.astype(jnp.bfloat16)                 # [B, G*D]

    parts = []
    for g in range(G):                            # static unroll: block-diag layer 2
        hg = h_bf[:, g * D:(g + 1) * D]           # [B, D]  (128-lane aligned slice)
        parts.append(
            jnp.dot(hg, w2_ref[g], preferred_element_type=jnp.float32))
    y = jnp.concatenate(parts, axis=1) + b2c_ref[...]   # [B, G*D], f32

    # Hardswish: y * relu6(y + 3) / 6
    y = y * jnp.clip(y + 3.0, 0.0, 6.0) * (1.0 / 6.0)
    o_ref[...] = y.astype(o_ref.dtype)            # single 512-lane store


def densenet1_forward(x, w1, b1, w2, b2):
    """Pallas equivalent of DenseNet1.forward.

    x  : [B, D]       float32
    w1 : [G, D, D]    first Linear weights per branch ([in, out] layout)
    b1 : [G, 1, D]    first Linear biases per branch
    w2 : [G, D, D]    second Linear weights per branch
    b2 : [G, 1, D]    second Linear biases per branch
    returns [B, G*D]  (= torch.cat((x1, x2, x3, x4), dim=1))
    """
    B, D = x.shape
    G = w1.shape[0]
    assert w1.shape == (G, D, D) and w2.shape == (G, D, D)
    assert b1.shape == (G, 1, D) and b2.shape == (G, 1, D)

    # Wrapper-side layout plumbing (fused by XLA, negligible cost):
    #   concat layer-1 params across branches; cast weights to bf16.
    w1c = jnp.transpose(w1, (1, 0, 2)).reshape(D, G * D).astype(jnp.bfloat16)
    b1c = jnp.transpose(b1, (1, 0, 2)).reshape(1, G * D)          # f32
    w2b = w2.astype(jnp.bfloat16)                                 # [G, D, D]
    b2c = jnp.transpose(b2, (1, 0, 2)).reshape(1, G * D)          # f32

    flops = 4 * G * B * D * D   # two [B,D]x[D,D] matmuls per branch
    bytes_accessed = (x.size * 4 + w1c.size * 2 + b1c.size * 4 +
                      w2b.size * 2 + b2c.size * 4 + B * G * D * 4)

    vmem = pl.BlockSpec(memory_space=pltpu.MemorySpace.VMEM)
    return pl.pallas_call(
        _densenet1_kernel,
        out_shape=jax.ShapeDtypeStruct((B, G * D), x.dtype),
        in_specs=[vmem, vmem, vmem, vmem, vmem],
        out_specs=vmem,
        cost_estimate=pl.CostEstimate(
            flops=flops, transcendentals=0, bytes_accessed=bytes_accessed),
    )(x, w1c, b1c, w2b, b2c)


def densenet1_ref(x, w1, b1, w2, b2):
    """Pure-JAX float32 reference (same math as the PyTorch module)."""
    outs = []
    for g in range(w1.shape[0]):
        h = jnp.maximum(x @ w1[g] + b1[g, 0], 0.0)
        y = h @ w2[g] + b2[g, 0]
        y = y * jnp.clip(y + 3.0, 0.0, 6.0) / 6.0
        outs.append(y)
    return jnp.concatenate(outs, axis=1)


if __name__ == "__main__":
    key = jax.random.PRNGKey(0)
    B, D, G = 8, 128, 4   # lay_dim = 128 keeps every block lane-dense

    kx, k1, k2, k3, k4 = jax.random.split(key, 5)
    scale = 1.0 / jnp.sqrt(jnp.float32(D))
    x = jax.random.normal(kx, (B, D), dtype=jnp.float32)
    w1 = jax.random.normal(k1, (G, D, D), dtype=jnp.float32) * scale
    b1 = jax.random.normal(k2, (G, 1, D), dtype=jnp.float32) * scale
    w2 = jax.random.normal(k3, (G, D, D), dtype=jnp.float32) * scale
    b2 = jax.random.normal(k4, (G, 1, D), dtype=jnp.float32) * scale

    y = densenet1_forward(x, w1, b1, w2, b2)
    y = jax.block_until_ready(y)

    y_ref = densenet1_ref(x, w1, b1, w2, b2)

    assert y.shape == (B, G * D)
    assert y.dtype == x.dtype
    # Weights run through the MXU in bf16 -> loosened tolerance vs f32 reference.
    assert jnp.allclose(y, y_ref, rtol=3e-2, atol=3e-2), (
        float(jnp.max(jnp.abs(y - y_ref)))
    )

    print("KERNEL_OK")
</pallas_src>

<mosaic_0001>
module attributes {stable_mosaic.version = 11 : i64} {
  func.func @_densenet1_kernel(%arg0: memref<8x128xf32, #tpu.memory_space<vmem>>, %arg1: memref<128x512xbf16, #tpu.memory_space<vmem>>, %arg2: memref<1x512xf32, #tpu.memory_space<vmem>>, %arg3: memref<4x128x128xbf16, #tpu.memory_space<vmem>>, %arg4: memref<1x512xf32, #tpu.memory_space<vmem>>, %arg5: memref<8x512xf32, #tpu.memory_space<vmem>>) attributes {dimension_semantics = [], scalar_prefetch = 0 : i64, scratch_operands = 0 : i64, tpu.core_type = #tpu.core_type<tc>} {
    %c0 = arith.constant 0 : index
    %c0_0 = arith.constant 0 : index
    %0 = vector.load %arg0[%c0, %c0_0] : memref<8x128xf32, #tpu.memory_space<vmem>>, vector<8x128xf32>
    %1 = arith.truncf %0 : vector<8x128xf32> to vector<8x128xbf16>
    %c0_1 = arith.constant 0 : index
    %c0_2 = arith.constant 0 : index
    %2 = vector.load %arg1[%c0_1, %c0_2] : memref<128x512xbf16, #tpu.memory_space<vmem>>, vector<128x512xbf16>
    %cst = arith.constant dense<0.000000e+00> : vector<8x512xf32>
    %3 = tpu.matmul %1, %2, %cst {dimension_numbers = #tpu.dot_dimension_numbers<[1], [0], [0], [1], [0, 0, 1, 1], [], []>} : vector<8x128xbf16>, vector<128x512xbf16>, vector<8x512xf32> -> vector<8x512xf32>
    %c0_3 = arith.constant 0 : index
    %c0_4 = arith.constant 0 : index
    %4 = vector.load %arg2[%c0_3, %c0_4] : memref<1x512xf32, #tpu.memory_space<vmem>>, vector<1x512xf32>
    %5 = vector.broadcast %4 : vector<1x512xf32> to vector<8x512xf32>
    %6 = arith.addf %3, %5 : vector<8x512xf32>
    %cst_5 = arith.constant 0.000000e+00 : f32
    %7 = vector.broadcast %cst_5 : f32 to vector<8x512xf32>
    %8 = arith.maximumf %6, %7 : vector<8x512xf32>
    %9 = arith.truncf %8 : vector<8x512xf32> to vector<8x512xbf16>
    %10 = vector.extract_strided_slice %9 {offsets = [0, 0], sizes = [8, 128], strides = [1, 1]} : vector<8x512xbf16> to vector<8x128xbf16>
    %c0_6 = arith.constant 0 : index
    %c0_7 = arith.constant 0 : index
    %c0_8 = arith.constant 0 : index
    %11 = vector.load %arg3[%c0_6, %c0_7, %c0_8] : memref<4x128x128xbf16, #tpu.memory_space<vmem>>, vector<1x128x128xbf16>
    %12 = vector.shape_cast %11 : vector<1x128x128xbf16> to vector<128x128xbf16>
    %cst_9 = arith.constant dense<0.000000e+00> : vector<8x128xf32>
    %13 = tpu.matmul %10, %12, %cst_9 {dimension_numbers = #tpu.dot_dimension_numbers<[1], [0], [0], [1], [0, 0, 1, 1], [], []>} : vector<8x128xbf16>, vector<128x128xbf16>, vector<8x128xf32> -> vector<8x128xf32>
    %14 = vector.extract_strided_slice %9 {offsets = [0, 128], sizes = [8, 128], strides = [1, 1]} : vector<8x512xbf16> to vector<8x128xbf16>
    %c1 = arith.constant 1 : index
    %c0_10 = arith.constant 0 : index
    %c0_11 = arith.constant 0 : index
    %15 = vector.load %arg3[%c1, %c0_10, %c0_11] : memref<4x128x128xbf16, #tpu.memory_space<vmem>>, vector<1x128x128xbf16>
    %16 = vector.shape_cast %15 : vector<1x128x128xbf16> to vector<128x128xbf16>
    %cst_12 = arith.constant dense<0.000000e+00> : vector<8x128xf32>
    %17 = tpu.matmul %14, %16, %cst_12 {dimension_numbers = #tpu.dot_dimension_numbers<[1], [0], [0], [1], [0, 0, 1, 1], [], []>} : vector<8x128xbf16>, vector<128x128xbf16>, vector<8x128xf32> -> vector<8x128xf32>
    %18 = vector.extract_strided_slice %9 {offsets = [0, 256], sizes = [8, 128], strides = [1, 1]} : vector<8x512xbf16> to vector<8x128xbf16>
    %c2 = arith.constant 2 : index
    %c0_13 = arith.constant 0 : index
    %c0_14 = arith.constant 0 : index
    %19 = vector.load %arg3[%c2, %c0_13, %c0_14] : memref<4x128x128xbf16, #tpu.memory_space<vmem>>, vector<1x128x128xbf16>
    %20 = vector.shape_cast %19 : vector<1x128x128xbf16> to vector<128x128xbf16>
    %cst_15 = arith.constant dense<0.000000e+00> : vector<8x128xf32>
    %21 = tpu.matmul %18, %20, %cst_15 {dimension_numbers = #tpu.dot_dimension_numbers<[1], [0], [0], [1], [0, 0, 1, 1], [], []>} : vector<8x128xbf16>, vector<128x128xbf16>, vector<8x128xf32> -> vector<8x128xf32>
    %22 = vector.extract_strided_slice %9 {offsets = [0, 384], sizes = [8, 128], strides = [1, 1]} : vector<8x512xbf16> to vector<8x128xbf16>
    %c3 = arith.constant 3 : index
    %c0_16 = arith.constant 0 : index
    %c0_17 = arith.constant 0 : index
    %23 = vector.load %arg3[%c3, %c0_16, %c0_17] : memref<4x128x128xbf16, #tpu.memory_space<vmem>>, vector<1x128x128xbf16>
    %24 = vector.shape_cast %23 : vector<1x128x128xbf16> to vector<128x128xbf16>
    %cst_18 = arith.constant dense<0.000000e+00> : vector<8x128xf32>
    %25 = tpu.matmul %22, %24, %cst_18 {dimension_numbers = #tpu.dot_dimension_numbers<[1], [0], [0], [1], [0, 0, 1, 1], [], []>} : vector<8x128xbf16>, vector<128x128xbf16>, vector<8x128xf32> -> vector<8x128xf32>
    %26 = tpu.concatenate %13, %17, %21, %25 in 1 : vector<8x128xf32>, vector<8x128xf32>, vector<8x128xf32>, vector<8x128xf32> -> vector<8x512xf32>
    %c0_19 = arith.constant 0 : index
    %c0_20 = arith.constant 0 : index
    %27 = vector.load %arg4[%c0_19, %c0_20] : memref<1x512xf32, #tpu.memory_space<vmem>>, vector<1x512xf32>
    %28 = vector.broadcast %27 : vector<1x512xf32> to vector<8x512xf32>
    %29 = arith.addf %26, %28 : vector<8x512xf32>
    %cst_21 = arith.constant 3.000000e+00 : f32
    %30 = vector.broadcast %cst_21 : f32 to vector<8x512xf32>
    %31 = arith.addf %29, %30 : vector<8x512xf32>
    %cst_22 = arith.constant 0.000000e+00 : f32
    %cst_23 = arith.constant 6.000000e+00 : f32
    %32 = vector.broadcast %cst_22 : f32 to vector<8x512xf32>
    %33 = arith.maximumf %32, %31 : vector<8x512xf32>
    %34 = vector.broadcast %cst_23 : f32 to vector<8x512xf32>
    %35 = arith.minimumf %34, %33 : vector<8x512xf32>
    %36 = arith.mulf %29, %35 : vector<8x512xf32>
    %cst_24 = arith.constant 0.166666672 : f32
    %37 = vector.broadcast %cst_24 : f32 to vector<8x512xf32>
    %38 = arith.mulf %36, %37 : vector<8x512xf32>
    %c0_25 = arith.constant 0 : index
    %c0_26 = arith.constant 0 : index
    %39 = vector.load %arg5[%c0_25, %c0_26] : memref<8x512xf32, #tpu.memory_space<vmem>>, vector<8x512xf32>
    tpu.vector_store %arg5[%c0_25, %c0_26], %38 {strides = array<i32>} : memref<8x512xf32, #tpu.memory_space<vmem>>, vector<8x512xf32>,
    return
  }
}

</mosaic_0001>

<llo_original>
// kernel: tpu_custom_call.1
$region0: #{tpu_custom_call.1}
  #allocation0 [shape = 'u32[]', space=smem, size = 0x4, offset = 0x4, fixed_abs, tag = 'smem constant byte address 0x4 - core index']
  #allocation1 [shape = 'u32[72,128]{1,0:T(1,128)}', space=vmem, size = 0x9000, scoped, tag = 'internal scratch']
  %s0 = inlined_call_operand.hbm [shape: f32[8,128], index: 0, kind: input, shape index: {}]
  %s1 = inlined_call_operand.hbm [shape: bf16[128,512], index: 1, kind: input, shape index: {}]
  %s2 = inlined_call_operand.hbm [shape: f32[1,512], index: 2, kind: input, shape index: {}]
  %s3 = inlined_call_operand.hbm [shape: bf16[4,128,128], index: 3, kind: input, shape index: {}]
  %s4 = inlined_call_operand.hbm [shape: f32[1,512], index: 4, kind: input, shape index: {}]
  %s5 = inlined_call_operand.hbm [shape: f32[8,512], index: 5, kind: output, shape index: {}]
  %s6 = sld [smem:[#allocation0]]
  $region50: #{tpu_custom_call.1} parent=0
    _
  %s8 = ssub.s32 1, %s6
  %s9 = scalar_select 0, %s8, %s6
  $region1: #{tpu_custom_call.1} parent=0
    #allocation2 [shape = 'u8[4096]{0}', space=vmem, size = 0x1000, scoped, tag = 'input window, operand 0, single buffered']
    #allocation3 [shape = 's32[1]{0}', space=sflag, size = 0x4, scoped, tag = 'scoped memory for tpu_custom_call.1']
    #allocation4 [shape = 's32[1]{0}', space=sflag, size = 0x4, scoped, tag = 'scoped memory for tpu_custom_call.1']
    #allocation5 [shape = 'u8[131072]{0}', space=vmem, size = 0x20000, scoped, tag = 'input window, operand 1, single buffered']
    #allocation6 [shape = 's32[1]{0}', space=sflag, size = 0x4, scoped, tag = 'scoped memory for tpu_custom_call.1']
    #allocation7 [shape = 'u8[2048]{0}', space=vmem, size = 0x800, scoped, tag = 'input window, operand 2, single buffered']
    #allocation8 [shape = 'u8[131072]{0}', space=vmem, size = 0x20000, scoped, tag = 'input window, operand 3, single buffered']
    #allocation9 [shape = 's32[1]{0}', space=sflag, size = 0x4, scoped, tag = 'scoped memory for tpu_custom_call.1']
    #allocation10 [shape = 'u8[2048]{0}', space=vmem, size = 0x800, scoped, tag = 'input window, operand 4, single buffered']
    #allocation11 [shape = 'u8[16384]{0}', space=vmem, size = 0x4000, scoped, tag = 'output window, operand 0, single buffered']
    %10 = vsyncpa [#allocation3], 0
    %11 = vsyncpa [#allocation6], 0
    %12 = vsyncpa [#allocation9], 0
    %13 = vsyncpa [#allocation4], 0
    // Predicated region
    $region2: #{tpu_custom_call.1} parent=1 // pred_check
      _
    $region3: #{tpu_custom_call.1} parent=1 // pred_check_branch
      %15 = sbr.rel (0) target = $region5
    $region4: #{tpu_custom_call.1} parent=1 // pred_region
      %17 = vsyncadd [#allocation3], 0
      %s19 = sshll.u32 %s0, 4
      %s20 = int_to_ptr.hbm [resolvable:$true] %s19
      %s21 = sshll.u32 [#allocation2], 4
      %s22 = int_to_ptr.vmem [resolvable:$true] %s21
      %24 = dma.hbm_to_vmem [thread:$0]  %s20, 128, %s22, [#allocation3]
    $region5: #{tpu_custom_call.1} parent=1 // pred_fallthru
      _
    // Predicated region
    $region6: #{tpu_custom_call.1} parent=1 // pred_check
      _
    $region7: #{tpu_custom_call.1} parent=1 // pred_check_branch
      %26 = sbr.rel (0) target = $region9
    $region8: #{tpu_custom_call.1} parent=1 // pred_region
      %28 = vsyncadd [#allocation6], 0
      %s29 = sshll.u32 %s1, 4
      %s30 = int_to_ptr.hbm [resolvable:$true] %s29
      %s31 = sshll.u32 [#allocation5], 4
      %s32 = int_to_ptr.vmem [resolvable:$true] %s31
      %37 = dma.hbm_to_vmem [thread:$0]  %s30, 4096, %s32, [#allocation6], 256, 256, 16
    $region9: #{tpu_custom_call.1} parent=1 // pred_fallthru
      _
    // Predicated region
    $region10: #{tpu_custom_call.1} parent=1 // pred_check
      _
    $region11: #{tpu_custom_call.1} parent=1 // pred_check_branch
      %39 = sbr.rel (0) target = $region13
    $region12: #{tpu_custom_call.1} parent=1 // pred_region
      %41 = vsyncadd [#allocation6], 0
      %s43 = sshll.u32 %s2, 4
      %s44 = int_to_ptr.hbm [resolvable:$true] %s43
      %s45 = sshll.u32 [#allocation7], 4
      %s46 = int_to_ptr.vmem [resolvable:$true] %s45
      %48 = dma.hbm_to_vmem [thread:$0]  %s44, 64, %s46, [#allocation6]
    $region13: #{tpu_custom_call.1} parent=1 // pred_fallthru
      _
    // Predicated region
    $region14: #{tpu_custom_call.1} parent=1 // pred_check
      _
    $region15: #{tpu_custom_call.1} parent=1 // pred_check_branch
      %50 = sbr.rel (0) target = $region17
    $region16: #{tpu_custom_call.1} parent=1 // pred_region
      %52 = vsyncadd [#allocation9], 0
      %s53 = sshll.u32 %s3, 4
      %s54 = int_to_ptr.hbm [resolvable:$true] %s53
      %s55 = sshll.u32 [#allocation8], 4
      %s56 = int_to_ptr.vmem [resolvable:$true] %s55
      %61 = dma.hbm_to_vmem [thread:$0]  %s54, 4096, %s56, [#allocation9], 64, 64, 4
    $region17: #{tpu_custom_call.1} parent=1 // pred_fallthru
      _
    // Predicated region
    $region18: #{tpu_custom_call.1} parent=1 // pred_check
      _
    $region19: #{tpu_custom_call.1} parent=1 // pred_check_branch
      %63 = sbr.rel (0) target = $region21
    $region20: #{tpu_custom_call.1} parent=1 // pred_region
      %65 = vsyncadd [#allocation9], 0
      %s67 = sshll.u32 %s4, 4
      %s68 = int_to_ptr.hbm [resolvable:$true] %s67
      %s69 = sshll.u32 [#allocation10], 4
      %s70 = int_to_ptr.vmem [resolvable:$true] %s69
      %72 = dma.hbm_to_vmem [thread:$0]  %s68, 64, %s70, [#allocation9]
    $region21: #{tpu_custom_call.1} parent=1 // pred_fallthru
      _
    // Predicated region
    $region22: #{tpu_custom_call.1} parent=1 // pred_check
      _
    $region23: #{tpu_custom_call.1} parent=1 // pred_check_branch
      %74 = sbr.rel (0) target = $region25
    $region24: #{tpu_custom_call.1} parent=1 // pred_region
      %76 = dma.done [#allocation3], 128
    $region25: #{tpu_custom_call.1} parent=1 // pred_fallthru
      _
    // Predicated region
    $region26: #{tpu_custom_call.1} parent=1 // pred_check
      _
    $region27: #{tpu_custom_call.1} parent=1 // pred_check_branch
      %78 = sbr.rel (0) target = $region29
    $region28: #{tpu_custom_call.1} parent=1 // pred_region
      %80 = dma.done [#allocation6], 4096
    $region29: #{tpu_custom_call.1} parent=1 // pred_fallthru
      _
    // Predicated region
    $region30: #{tpu_custom_call.1} parent=1 // pred_check
      _
    $region31: #{tpu_custom_call.1} parent=1 // pred_check_branch
      %82 = sbr.rel (0) target = $region33
    $region32: #{tpu_custom_call.1} parent=1 // pred_region
      %84 = dma.done [#allocation6], 64
    $region33: #{tpu_custom_call.1} parent=1 // pred_fallthru
      _
    // Predicated region
    $region34: #{tpu_custom_call.1} parent=1 // pred_check
      _
    $region35: #{tpu_custom_call.1} parent=1 // pred_check_branch
      %86 = sbr.rel (0) target = $region37
    $region36: #{tpu_custom_call.1} parent=1 // pred_region
      %88 = dma.done [#allocation9], 4096
    $region37: #{tpu_custom_call.1} parent=1 // pred_fallthru
      _
    // Predicated region
    $region38: #{tpu_custom_call.1} parent=1 // pred_check
      _
    $region39: #{tpu_custom_call.1} parent=1 // pred_check_branch
      %90 = sbr.rel (0) target = $region41
    $region40: #{tpu_custom_call.1} parent=1 // pred_region
      %92 = dma.done [#allocation9], 64
    $region41: #{tpu_custom_call.1} parent=1 // pred_fallthru
      _
    %v93 = vld [vmem:[#allocation2] sm:$0xff]
    %v94 = vpack.c.bf16 %v93, %v93
    %v95 = vld [vmem:[#allocation5] sm:$0xff]
    %v96 = vld [vmem:[#allocation5 + $0x8] sm:$0xff]
    %v97 = vld [vmem:[#allocation5 + $0x10] sm:$0xff]
    %v98 = vld [vmem:[#allocation5 + $0x18] sm:$0xff]
    %v99 = vld [vmem:[#allocation5 + $0x20] sm:$0xff]
    %v100 = vld [vmem:[#allocation5 + $0x28] sm:$0xff]
    %v101 = vld [vmem:[#allocation5 + $0x30] sm:$0xff]
    %v102 = vld [vmem:[#allocation5 + $0x38] sm:$0xff]
    %v103 = vld [vmem:[#allocation5 + $0x40] sm:$0xff]
    %v104 = vld [vmem:[#allocation5 + $0x48] sm:$0xff]
    %v105 = vld [vmem:[#allocation5 + $0x50] sm:$0xff]
    %v106 = vld [vmem:[#allocation5 + $0x58] sm:$0xff]
    %v107 = vld [vmem:[#allocation5 + $0x60] sm:$0xff]
    %v108 = vld [vmem:[#allocation5 + $0x68] sm:$0xff]
    %v109 = vld [vmem:[#allocation5 + $0x70] sm:$0xff]
    %v110 = vld [vmem:[#allocation5 + $0x78] sm:$0xff]
    %v111 = vld [vmem:[#allocation5 + $0x80] sm:$0xff]
    %v112 = vld [vmem:[#allocation5 + $0x88] sm:$0xff]
    %v113 = vld [vmem:[#allocation5 + $0x90] sm:$0xff]
    %v114 = vld [vmem:[#allocation5 + $0x98] sm:$0xff]
    %v115 = vld [vmem:[#allocation5 + $0xa0] sm:$0xff]
    %v116 = vld [vmem:[#allocation5 + $0xa8] sm:$0xff]
    %v117 = vld [vmem:[#allocation5 + $0xb0] sm:$0xff]
    %v118 = vld [vmem:[#allocation5 + $0xb8] sm:$0xff]
    %v119 = vld [vmem:[#allocation5 + $0xc0] sm:$0xff]
    %v120 = vld [vmem:[#allocation5 + $0xc8] sm:$0xff]
    %v121 = vld [vmem:[#allocation5 + $0xd0] sm:$0xff]
    %v122 = vld [vmem:[#allocation5 + $0xd8] sm:$0xff]
    %v123 = vld [vmem:[#allocation5 + $0xe0] sm:$0xff]
    %v124 = vld [vmem:[#allocation5 + $0xe8] sm:$0xff]
    %v125 = vld [vmem:[#allocation5 + $0xf0] sm:$0xff]
    %v126 = vld [vmem:[#allocation5 + $0xf8] sm:$0xff]
    %v127 = vld [vmem:[#allocation7] sm:$0xf]
    %v129 = vperm.slane %v127, 0
    %v130 = vperm.slane %v127, 1
    %v131 = vperm.slane %v127, 2
    %v132 = vperm.slane %v127, 3
    %v169 = vunpack.c.l.b16 %v95
    %v170 = vunpack.c.h.b16 %v95
    %v171 = vunpack.c.l.b16 %v96
    %v172 = vunpack.c.h.b16 %v96
    %v173 = vunpack.c.l.b16 %v97
    %v174 = vunpack.c.h.b16 %v97
    %v175 = vunpack.c.l.b16 %v98
    %v176 = vunpack.c.h.b16 %v98
    %v177 = vunpack.c.l.b16 %v99
    %v178 = vunpack.c.h.b16 %v99
    %v179 = vunpack.c.l.b16 %v100
    %v180 = vunpack.c.h.b16 %v100
    %v181 = vunpack.c.l.b16 %v101
    %v182 = vunpack.c.h.b16 %v101
    %v183 = vunpack.c.l.b16 %v102
    %v184 = vunpack.c.h.b16 %v102
    %v185 = vunpack.c.l.b16 %v103
    %v186 = vunpack.c.h.b16 %v103
    %v187 = vunpack.c.l.b16 %v104
    %v188 = vunpack.c.h.b16 %v104
    %v189 = vunpack.c.l.b16 %v105
    %v190 = vunpack.c.h.b16 %v105
    %v191 = vunpack.c.l.b16 %v106
    %v192 = vunpack.c.h.b16 %v106
    %v193 = vunpack.c.l.b16 %v107
    %v194 = vunpack.c.h.b16 %v107
    %v195 = vunpack.c.l.b16 %v108
    %v196 = vunpack.c.h.b16 %v108
    %v197 = vunpack.c.l.b16 %v109
    %v198 = vunpack.c.h.b16 %v109
    %v199 = vunpack.c.l.b16 %v110
    %v200 = vunpack.c.h.b16 %v110
    %v201 = vunpack.c.l.b16 %v111
    %v202 = vunpack.c.h.b16 %v111
    %v203 = vunpack.c.l.b16 %v112
    %v204 = vunpack.c.h.b16 %v112
    %v205 = vunpack.c.l.b16 %v113
    %v206 = vunpack.c.h.b16 %v113
    %v207 = vunpack.c.l.b16 %v114
    %v208 = vunpack.c.h.b16 %v114
    %v209 = vunpack.c.l.b16 %v115
    %v210 = vunpack.c.h.b16 %v115
    %v211 = vunpack.c.l.b16 %v116
    %v212 = vunpack.c.h.b16 %v116
    %v213 = vunpack.c.l.b16 %v117
    %v214 = vunpack.c.h.b16 %v117
    %v215 = vunpack.c.l.b16 %v118
    %v216 = vunpack.c.h.b16 %v118
    %v217 = vunpack.c.l.b16 %v119
    %v218 = vunpack.c.h.b16 %v119
    %v219 = vunpack.c.l.b16 %v120
    %v220 = vunpack.c.h.b16 %v120
    %v221 = vunpack.c.l.b16 %v121
    %v222 = vunpack.c.h.b16 %v121
    %v223 = vunpack.c.l.b16 %v122
    %v224 = vunpack.c.h.b16 %v122
    %v225 = vunpack.c.l.b16 %v123
    %v226 = vunpack.c.h.b16 %v123
    %v227 = vunpack.c.l.b16 %v124
    %v228 = vunpack.c.h.b16 %v124
    %v229 = vunpack.c.l.b16 %v125
    %v230 = vunpack.c.h.b16 %v125
    %v231 = vunpack.c.l.b16 %v126
    %v232 = vunpack.c.h.b16 %v126
    %v233 = vpack.c.b16 %v173, %v169
    %v234 = vpack.c.b16 %v174, %v170
    %v235 = vpack.c.b16 %v175, %v171
    %v236 = vpack.c.b16 %v176, %v172
    %v237 = vpack.c.b16 %v181, %v177
    %v238 = vpack.c.b16 %v182, %v178
    %v239 = vpack.c.b16 %v183, %v179
    %v240 = vpack.c.b16 %v184, %v180
    %v241 = vpack.c.b16 %v189, %v185
    %v242 = vpack.c.b16 %v190, %v186
    %v243 = vpack.c.b16 %v191, %v187
    %v244 = vpack.c.b16 %v192, %v188
    %v245 = vpack.c.b16 %v197, %v193
    %v246 = vpack.c.b16 %v198, %v194
    %v247 = vpack.c.b16 %v199, %v195
    %v248 = vpack.c.b16 %v200, %v196
    %v249 = vpack.c.b16 %v205, %v201
    %v250 = vpack.c.b16 %v206, %v202
    %v251 = vpack.c.b16 %v207, %v203
    %v252 = vpack.c.b16 %v208, %v204
    %v253 = vpack.c.b16 %v213, %v209
    %v254 = vpack.c.b16 %v214, %v210
    %v255 = vpack.c.b16 %v215, %v211
    %v256 = vpack.c.b16 %v216, %v212
    %v257 = vpack.c.b16 %v221, %v217
    %v258 = vpack.c.b16 %v222, %v218
    %v259 = vpack.c.b16 %v223, %v219
    %v260 = vpack.c.b16 %v224, %v220
    %v261 = vpack.c.b16 %v229, %v225
    %v262 = vpack.c.b16 %v230, %v226
    %v263 = vpack.c.b16 %v231, %v227
    %v264 = vpack.c.b16 %v232, %v228
    %297 = vmatpush.bf16.msra.mxu0 %v261
    %298 = vmatpush.bf16.msra.mxu0 %v257
    %299 = vmatpush.bf16.msra.mxu0 %v253
    %300 = vmatpush.bf16.msra.mxu0 %v249
    %301 = vmatpush.bf16.msra.mxu0 %v245
    %302 = vmatpush.bf16.msra.mxu0 %v241
    %303 = vmatpush.bf16.msra.mxu0 %v237
    %304 = vmatpush.bf16.msra.mxu0 %v233
    %305 = vmatmul.bf16.gmra.mxu0 %v94
    %v306 = vpop.f32.mrf.mxu0
    %v307 = vadd.f32 %v129, %v306
    %v308 = vpop.f32.mrf.mxu0
    %309 = vdwg.mxu0
    %310 = vmatpush.bf16.msra.mxu0 %v262
    %311 = vmatpush.bf16.msra.mxu0 %v258
    %312 = vmatpush.bf16.msra.mxu0 %v254
    %313 = vmatpush.bf16.msra.mxu0 %v250
    %314 = vmatpush.bf16.msra.mxu0 %v246
    %315 = vmatpush.bf16.msra.mxu0 %v242
    %316 = vmatpush.bf16.msra.mxu0 %v238
    %317 = vmatpush.bf16.msra.mxu0 %v234
    %318 = vmatmul.bf16.gmra.mxu0 %v94
    %v319 = vpop.f32.mrf.mxu0
    %v320 = vadd.f32 %v130, %v319
    %v321 = vpop.f32.mrf.mxu0
    %322 = vdwg.mxu0
    %323 = vmatpush.bf16.msra.mxu0 %v263
    %324 = vmatpush.bf16.msra.mxu0 %v259
    %325 = vmatpush.bf16.msra.mxu0 %v255
    %326 = vmatpush.bf16.msra.mxu0 %v251
    %327 = vmatpush.bf16.msra.mxu0 %v247
    %328 = vmatpush.bf16.msra.mxu0 %v243
    %329 = vmatpush.bf16.msra.mxu0 %v239
    %330 = vmatpush.bf16.msra.mxu0 %v235
    %331 = vmatmul.bf16.gmra.mxu0 %v94
    %v332 = vpop.f32.mrf.mxu0
    %v333 = vadd.f32 %v131, %v332
    %v334 = vpop.f32.mrf.mxu0
    %335 = vdwg.mxu0
    %336 = vmatpush.bf16.msra.mxu0 %v264
    %337 = vmatpush.bf16.msra.mxu0 %v260
    %338 = vmatpush.bf16.msra.mxu0 %v256
    %339 = vmatpush.bf16.msra.mxu0 %v252
    %340 = vmatpush.bf16.msra.mxu0 %v248
    %341 = vmatpush.bf16.msra.mxu0 %v244
    %342 = vmatpush.bf16.msra.mxu0 %v240
    %343 = vmatpush.bf16.msra.mxu0 %v236
    %344 = vmatmul.bf16.gmra.mxu0 %v94
    %v345 = vpop.f32.mrf.mxu0
    %v346 = vadd.f32 %v132, %v345
    %v347 = vpop.f32.mrf.mxu0
    %348 = vdwg.mxu0
    %v349 = vmax.f32 %v307, 0.0
    %v350 = vmax.f32 %v320, 0.0
    %v351 = vmax.f32 %v333, 0.0
    %v352 = vmax.f32 %v346, 0.0
    %v353 = vpack.c.bf16 %v350, %v349
    %v354 = vpack.c.bf16 %v352, %v351
    %v355 = vld [vmem:[#allocation8] sm:$0xf]
    %v356 = vld [vmem:[#allocation8 + $0x4] sm:$0xf]
    %v357 = vld [vmem:[#allocation8 + $0x8] sm:$0xf]
    %v358 = vld [vmem:[#allocation8 + $0xc] sm:$0xf]
    %v359 = vld [vmem:[#allocation8 + $0x10] sm:$0xf]
    %v360 = vld [vmem:[#allocation8 + $0x14] sm:$0xf]
    %v361 = vld [vmem:[#allocation8 + $0x18] sm:$0xf]
    %v362 = vld [vmem:[#allocation8 + $0x1c] sm:$0xf]
    %v363 = vld [vmem:[#allocation8 + $0x20] sm:$0xf]
    %v364 = vld [vmem:[#allocation8 + $0x24] sm:$0xf]
    %v365 = vld [vmem:[#allocation8 + $0x28] sm:$0xf]
    %v366 = vld [vmem:[#allocation8 + $0x2c] sm:$0xf]
    %v367 = vld [vmem:[#allocation8 + $0x30] sm:$0xf]
    %v368 = vld [vmem:[#allocation8 + $0x34] sm:$0xf]
    %v369 = vld [vmem:[#allocation8 + $0x38] sm:$0xf]
    %v370 = vld [vmem:[#allocation8 + $0x3c] sm:$0xf]
    %v387 = vunpack.c.l.b16 %v355
    %v388 = vunpack.c.l.b16 %v356
    %v389 = vunpack.c.l.b16 %v357
    %v390 = vunpack.c.l.b16 %v358
    %v391 = vunpack.c.l.b16 %v359
    %v392 = vunpack.c.l.b16 %v360
    %v393 = vunpack.c.l.b16 %v361
    %v394 = vunpack.c.l.b16 %v362
    %v395 = vunpack.c.l.b16 %v363
    %v396 = vunpack.c.l.b16 %v364
    %v397 = vunpack.c.l.b16 %v365
    %v398 = vunpack.c.l.b16 %v366
    %v399 = vunpack.c.l.b16 %v367
    %v400 = vunpack.c.l.b16 %v368
    %v401 = vunpack.c.l.b16 %v369
    %v402 = vunpack.c.l.b16 %v370
    %v403 = vpack.c.b16 %v388, %v387
    %v404 = vpack.c.b16 %v390, %v389
    %v405 = vpack.c.b16 %v392, %v391
    %v406 = vpack.c.b16 %v394, %v393
    %v407 = vpack.c.b16 %v396, %v395
    %v408 = vpack.c.b16 %v398, %v397
    %v409 = vpack.c.b16 %v400, %v399
    %v410 = vpack.c.b16 %v402, %v401
    %419 = vmatpush.bf16.msra.mxu0 %v410
    %420 = vmatpush.bf16.msra.mxu0 %v409
    %421 = vmatpush.bf16.msra.mxu0 %v408
    %422 = vmatpush.bf16.msra.mxu0 %v407
    %423 = vmatpush.bf16.msra.mxu0 %v406
    %424 = vmatpush.bf16.msra.mxu0 %v405
    %425 = vmatpush.bf16.msra.mxu0 %v404
    %426 = vmatpush.bf16.msra.mxu0 %v403
    %427 = vmatmul.bf16.gmra.mxu0 %v353
    %v428 = vpop.f32.mrf.mxu0
    %v429 = vadd.f32 0.0, %v428
    %v430 = vpop.f32.mrf.mxu0
    %431 = vdwg.mxu0
    %s432 = scalar_lea.vmem [#allocation8], 64
    %v433 = vld [vmem:[%s432] sm:$0xf]
    %v434 = vld [vmem:[%s432 + $0x4] sm:$0xf]
    %v435 = vld [vmem:[%s432 + $0x8] sm:$0xf]
    %v436 = vld [vmem:[%s432 + $0xc] sm:$0xf]
    %v437 = vld [vmem:[%s432 + $0x10] sm:$0xf]
    %v438 = vld [vmem:[%s432 + $0x14] sm:$0xf]
    %v439 = vld [vmem:[%s432 + $0x18] sm:$0xf]
    %v440 = vld [vmem:[%s432 + $0x1c] sm:$0xf]
    %v441 = vld [vmem:[%s432 + $0x20] sm:$0xf]
    %v442 = vld [vmem:[%s432 + $0x24] sm:$0xf]
    %v443 = vld [vmem:[%s432 + $0x28] sm:$0xf]
    %v444 = vld [vmem:[%s432 + $0x2c] sm:$0xf]
    %v445 = vld [vmem:[%s432 + $0x30] sm:$0xf]
    %v446 = vld [vmem:[%s432 + $0x34] sm:$0xf]
    %v447 = vld [vmem:[%s432 + $0x38] sm:$0xf]
    %v448 = vld [vmem:[%s432 + $0x3c] sm:$0xf]
    %v450 = vunpack.c.h.b16 %v353
    %v451 = vpack.c.b16 %v450, %v450
    %v469 = vunpack.c.l.b16 %v433
    %v470 = vunpack.c.l.b16 %v434
    %v471 = vunpack.c.l.b16 %v435
    %v472 = vunpack.c.l.b16 %v436
    %v473 = vunpack.c.l.b16 %v437
    %v474 = vunpack.c.l.b16 %v438
    %v475 = vunpack.c.l.b16 %v439
    %v476 = vunpack.c.l.b16 %v440
    %v477 = vunpack.c.l.b16 %v441
    %v478 = vunpack.c.l.b16 %v442
    %v479 = vunpack.c.l.b16 %v443
    %v480 = vunpack.c.l.b16 %v444
    %v481 = vunpack.c.l.b16 %v445
    %v482 = vunpack.c.l.b16 %v446
    %v483 = vunpack.c.l.b16 %v447
    %v484 = vunpack.c.l.b16 %v448
    %v485 = vpack.c.b16 %v470, %v469
    %v486 = vpack.c.b16 %v472, %v471
    %v487 = vpack.c.b16 %v474, %v473
    %v488 = vpack.c.b16 %v476, %v475
    %v489 = vpack.c.b16 %v478, %v477
    %v490 = vpack.c.b16 %v480, %v479
    %v491 = vpack.c.b16 %v482, %v481
    %v492 = vpack.c.b16 %v484, %v483
    %501 = vmatpush.bf16.msra.mxu0 %v492
    %502 = vmatpush.bf16.msra.mxu0 %v491
    %503 = vmatpush.bf16.msra.mxu0 %v490
    %504 = vmatpush.bf16.msra.mxu0 %v489
    %505 = vmatpush.bf16.msra.mxu0 %v488
    %506 = vmatpush.bf16.msra.mxu0 %v487
    %507 = vmatpush.bf16.msra.mxu0 %v486
    %508 = vmatpush.bf16.msra.mxu0 %v485
    %509 = vmatmul.bf16.gmra.mxu0 %v451
    %v510 = vpop.f32.mrf.mxu0
    %v511 = vadd.f32 0.0, %v510
    %v512 = vpop.f32.mrf.mxu0
    %513 = vdwg.mxu0
    %s514 = scalar_lea.vmem [#allocation8], 128
    %v515 = vld [vmem:[%s514] sm:$0xf]
    %v516 = vld [vmem:[%s514 + $0x4] sm:$0xf]
    %v517 = vld [vmem:[%s514 + $0x8] sm:$0xf]
    %v518 = vld [vmem:[%s514 + $0xc] sm:$0xf]
    %v519 = vld [vmem:[%s514 + $0x10] sm:$0xf]
    %v520 = vld [vmem:[%s514 + $0x14] sm:$0xf]
    %v521 = vld [vmem:[%s514 + $0x18] sm:$0xf]
    %v522 = vld [vmem:[%s514 + $0x1c] sm:$0xf]
    %v523 = vld [vmem:[%s514 + $0x20] sm:$0xf]
    %v524 = vld [vmem:[%s514 + $0x24] sm:$0xf]
    %v525 = vld [vmem:[%s514 + $0x28] sm:$0xf]
    %v526 = vld [vmem:[%s514 + $0x2c] sm:$0xf]
    %v527 = vld [vmem:[%s514 + $0x30] sm:$0xf]
    %v528 = vld [vmem:[%s514 + $0x34] sm:$0xf]
    %v529 = vld [vmem:[%s514 + $0x38] sm:$0xf]
    %v530 = vld [vmem:[%s514 + $0x3c] sm:$0xf]
    %v547 = vunpack.c.l.b16 %v515
    %v548 = vunpack.c.l.b16 %v516
    %v549 = vunpack.c.l.b16 %v517
    %v550 = vunpack.c.l.b16 %v518
    %v551 = vunpack.c.l.b16 %v519
    %v552 = vunpack.c.l.b16 %v520
    %v553 = vunpack.c.l.b16 %v521
    %v554 = vunpack.c.l.b16 %v522
    %v555 = vunpack.c.l.b16 %v523
    %v556 = vunpack.c.l.b16 %v524
    %v557 = vunpack.c.l.b16 %v525
    %v558 = vunpack.c.l.b16 %v526
    %v559 = vunpack.c.l.b16 %v527
    %v560 = vunpack.c.l.b16 %v528
    %v561 = vunpack.c.l.b16 %v529
    %v562 = vunpack.c.l.b16 %v530
    %v563 = vpack.c.b16 %v548, %v547
    %v564 = vpack.c.b16 %v550, %v549
    %v565 = vpack.c.b16 %v552, %v551
    %v566 = vpack.c.b16 %v554, %v553
    %v567 = vpack.c.b16 %v556, %v555
    %v568 = vpack.c.b16 %v558, %v557
    %v569 = vpack.c.b16 %v560, %v559
    %v570 = vpack.c.b16 %v562, %v561
    %579 = vmatpush.bf16.msra.mxu0 %v570
    %580 = vmatpush.bf16.msra.mxu0 %v569
    %581 = vmatpush.bf16.msra.mxu0 %v568
    %582 = vmatpush.bf16.msra.mxu0 %v567
    %583 = vmatpush.bf16.msra.mxu0 %v566
    %584 = vmatpush.bf16.msra.mxu0 %v565
    %585 = vmatpush.bf16.msra.mxu0 %v564
    %586 = vmatpush.bf16.msra.mxu0 %v563
    %587 = vmatmul.bf16.gmra.mxu0 %v354
    %v588 = vpop.f32.mrf.mxu0
    %v589 = vadd.f32 0.0, %v588
    %v590 = vpop.f32.mrf.mxu0
    %591 = vdwg.mxu0
    %s592 = scalar_lea.vmem [#allocation8], 192
    %v593 = vld [vmem:[%s592] sm:$0xf]
    %v594 = vld [vmem:[%s592 + $0x4] sm:$0xf]
    %v595 = vld [vmem:[%s592 + $0x8] sm:$0xf]
    %v596 = vld [vmem:[%s592 + $0xc] sm:$0xf]
    %v597 = vld [vmem:[%s592 + $0x10] sm:$0xf]
    %v598 = vld [vmem:[%s592 + $0x14] sm:$0xf]
    %v599 = vld [vmem:[%s592 + $0x18] sm:$0xf]
    %v600 = vld [vmem:[%s592 + $0x1c] sm:$0xf]
    %v601 = vld [vmem:[%s592 + $0x20] sm:$0xf]
    %v602 = vld [vmem:[%s592 + $0x24] sm:$0xf]
    %v603 = vld [vmem:[%s592 + $0x28] sm:$0xf]
    %v604 = vld [vmem:[%s592 + $0x2c] sm:$0xf]
    %v605 = vld [vmem:[%s592 + $0x30] sm:$0xf]
    %v606 = vld [vmem:[%s592 + $0x34] sm:$0xf]
    %v607 = vld [vmem:[%s592 + $0x38] sm:$0xf]
    %v608 = vld [vmem:[%s592 + $0x3c] sm:$0xf]
    %v610 = vunpack.c.h.b16 %v354
    %v611 = vpack.c.b16 %v610, %v610
    %v629 = vunpack.c.l.b16 %v593
    %v630 = vunpack.c.l.b16 %v594
    %v631 = vunpack.c.l.b16 %v595
    %v632 = vunpack.c.l.b16 %v596
    %v633 = vunpack.c.l.b16 %v597
    %v634 = vunpack.c.l.b16 %v598
    %v635 = vunpack.c.l.b16 %v599
    %v636 = vunpack.c.l.b16 %v600
    %v637 = vunpack.c.l.b16 %v601
    %v638 = vunpack.c.l.b16 %v602
    %v639 = vunpack.c.l.b16 %v603
    %v640 = vunpack.c.l.b16 %v604
    %v641 = vunpack.c.l.b16 %v605
    %v642 = vunpack.c.l.b16 %v606
    %v643 = vunpack.c.l.b16 %v607
    %v644 = vunpack.c.l.b16 %v608
    %v645 = vpack.c.b16 %v630, %v629
    %v646 = vpack.c.b16 %v632, %v631
    %v647 = vpack.c.b16 %v634, %v633
    %v648 = vpack.c.b16 %v636, %v635
    %v649 = vpack.c.b16 %v638, %v637
    %v650 = vpack.c.b16 %v640, %v639
    %v651 = vpack.c.b16 %v642, %v641
    %v652 = vpack.c.b16 %v644, %v643
    %661 = vmatpush.bf16.msra.mxu0 %v652
    %662 = vmatpush.bf16.msra.mxu0 %v651
    %663 = vmatpush.bf16.msra.mxu0 %v650
    %664 = vmatpush.bf16.msra.mxu0 %v649
    %665 = vmatpush.bf16.msra.mxu0 %v648
    %666 = vmatpush.bf16.msra.mxu0 %v647
    %667 = vmatpush.bf16.msra.mxu0 %v646
    %668 = vmatpush.bf16.msra.mxu0 %v645
    %669 = vmatmul.bf16.gmra.mxu0 %v611
    %v670 = vpop.f32.mrf.mxu0
    %v671 = vadd.f32 0.0, %v670
    %v672 = vpop.f32.mrf.mxu0
    %673 = vdwg.mxu0
    %v674 = vld [vmem:[#allocation10] sm:$0xf]
    %v676 = vperm.slane %v674, 0
    %v677 = vperm.slane %v674, 1
    %v678 = vperm.slane %v674, 2
    %v679 = vperm.slane %v674, 3
    %v684 = vadd.f32 %v429, %v676
    %v685 = vadd.f32 %v511, %v677
    %v686 = vadd.f32 %v589, %v678
    %v687 = vadd.f32 %v671, %v679
    %v688 = vadd.f32 %v684, 3.0
    %v689 = vadd.f32 %v685, 3.0
    %v690 = vadd.f32 %v686, 3.0
    %v691 = vadd.f32 %v687, 3.0
    %v692 = vmax.f32 %v688, 0.0
    %v693 = vmax.f32 %v689, 0.0
    %v694 = vmax.f32 %v690, 0.0
    %v695 = vmax.f32 %v691, 0.0
    %v696 = vmin.f32 %v692, 6.0
    %v697 = vmin.f32 %v693, 6.0
    %v698 = vmin.f32 %v694, 6.0
    %v699 = vmin.f32 %v695, 6.0
    %v700 = vmul.f32 %v684, %v696
    %v701 = vmul.f32 %v685, %v697
    %v702 = vmul.f32 %v686, %v698
    %v703 = vmul.f32 %v687, %v699
    %v704 = vmul.f32 %v700, 0.16666667
    %v705 = vmul.f32 %v701, 0.16666667
    %v706 = vmul.f32 %v702, 0.16666667
    %v707 = vmul.f32 %v703, 0.16666667
    %708 = vst [vmem:[#allocation11] sm:$0xff] %v704
    %709 = vst [vmem:[#allocation11 + $0x8] sm:$0xff] %v705
    %710 = vst [vmem:[#allocation11 + $0x10] sm:$0xff] %v706
    %711 = vst [vmem:[#allocation11 + $0x18] sm:$0xff] %v707
    // Predicated region
    $region42: #{tpu_custom_call.1} parent=1 // pred_check
      _
    $region43: #{tpu_custom_call.1} parent=1 // pred_check_branch
      %713 = sbr.rel (0) target = $region45
    $region44: #{tpu_custom_call.1} parent=1 // pred_region
      %715 = vsyncadd [#allocation4], 0
      %s717 = sshll.u32 [#allocation11], 4
      %s718 = int_to_ptr.vmem [resolvable:$true] %s717
      %s719 = sshll.u32 %s5, 4
      %s720 = int_to_ptr.hbm [resolvable:$true] %s719
      %722 = dma.vmem_to_hbm [thread:$0]  %s718, 512, %s720, [#allocation4]
    $region45: #{tpu_custom_call.1} parent=1 // pred_fallthru
      _
    // Predicated region
    $region46: #{tpu_custom_call.1} parent=1 // pred_check
      _
    $region47: #{tpu_custom_call.1} parent=1 // pred_check_branch
      %724 = sbr.rel (0) target = $region49
    $region48: #{tpu_custom_call.1} parent=1 // pred_region
      %726 = dma.done [#allocation4], 512
    $region49: #{tpu_custom_call.1} parent=1 // pred_fallthru
      _
    %727 = vsyncpa [#allocation3], 1
    %728 = vsyncpa [#allocation6], 1
    %729 = vsyncpa [#allocation9], 1
    %730 = vsyncpa [#allocation4], 1

</llo_original>
